<compile_context>
chip_gen: v7x
topology: tpu7x:2x2x1
jax: 0.10.0
libtpu: 0.0.40
codegen_flags: <defaults>
</compile_context>

<pallas_src>
import functools

import jax
import jax.numpy as jnp
from jax.experimental import pallas as pl
from jax.experimental.pallas import tpu as pltpu


_LANE = 128  # lane width; last-dim padding multiple


def _round_up(x, m):
    return (x + m - 1) // m * m


def _vmem_capacity_bytes():
    """Physical VMEM per TensorCore; conservative (v7x) fallback if unknown."""
    try:
        return int(pltpu.get_tpu_info().vmem_capacity_bytes)
    except Exception:
        return 64 * 1024 * 1024


def _supports_pipeline_mode():
    if not hasattr(pl, "Buffered"):
        return False
    try:
        pl.BlockSpec((8, 128), lambda i: (0, 0), pipeline_mode=pl.Buffered(1))
        return True
    except TypeError:
        return False


_HAS_PIPELINE_MODE = _supports_pipeline_mode()


def _make_spec(shape, index_map, buffers=None):
    """BlockSpec, optionally with an explicit pipeline buffer count."""
    if buffers is not None and _HAS_PIPELINE_MODE:
        return pl.BlockSpec(shape, index_map, pipeline_mode=pl.Buffered(buffers))
    return pl.BlockSpec(shape, index_map)


def _adapter_kernel(x_ref, wd_ref, bd_ref, wu_ref, bu_ref, o_ref):
    """Fused bottleneck adapter: out = x + relu(x @ Wd + bd) @ Wu + bu."""
    x = x_ref[...]                                                 # (tm, H)
    # Down projection on the MXU with f32 accumulation; bias + ReLU in f32.
    h = jnp.dot(x, wd_ref[...], preferred_element_type=jnp.float32)
    h = jnp.maximum(h + bd_ref[...].astype(jnp.float32), 0.0)      # (tm, B) f32
    # Up projection (operand cast back to the weight dtype for the MXU, f32
    # accumulator), then bias + residual in f32 vregs; cast only at the store.
    up = jnp.dot(h.astype(wu_ref.dtype), wu_ref[...],
                 preferred_element_type=jnp.float32)               # (tm, H) f32
    o_ref[...] = (x.astype(jnp.float32) + up
                  + bu_ref[...].astype(jnp.float32)).astype(o_ref.dtype)


@functools.partial(jax.jit, static_argnames=("tile_m",))
def adapter_fwd(x, params, *, tile_m=512):
    """One bottleneck adapter.  x: (batch, seq, hidden); params: dict of
    w_down (h,b), b_down (b,), w_up (b,h), b_up (h,).

    Kernel I/O dtype == x.dtype (no hidden astype passes).  For the bf16
    speed mode, pass bf16 x/params from the model level.
    """
    batch, seq, hidden = x.shape
    bottleneck = params["w_down"].shape[1]
    dtype = jnp.dtype(x.dtype)
    itemsize = dtype.itemsize

    # ---- lane-dense column padding (only if not already 128-aligned) ------
    H = _round_up(hidden, _LANE)
    B = _round_up(bottleneck, _LANE)
    pad_hidden = H != hidden
    needs_col_pad = pad_hidden or (B != bottleneck)

    n = batch * seq
    row_mult = 8 if itemsize >= 4 else 16   # sublane packing multiple

    # ---- generation-aware VMEM budget --------------------------------------
    vmem_cap = _vmem_capacity_bytes()            # 64 MiB v7x, 128 MiB v5e/v6e
    vmem_limit = int(vmem_cap * 0.8)             # headroom for Mosaic scratch
    tile_budget = int(vmem_limit * 0.75)

    # Weights/biases: resident; single-buffered when pipeline_mode supported.
    weight_bytes = (2 * H * B + B + H) * itemsize
    if not _HAS_PIPELINE_MODE:
        weight_bytes *= 2                        # default double-buffering

    # Per-row VMEM: x/out double buffers + f32 intermediates
    # (up-proj accumulator + f32 residual copy + f32 h + its cast copy).
    per_row = 4 * H * itemsize + 8 * H + 4 * B + B * itemsize

    avail = tile_budget - weight_bytes
    if avail < row_mult * per_row:
        # TODO(synk): for very large adapters, tile the weights over a second
        # ("arbitrary") grid axis instead of failing here.
        raise ValueError(
            f"adapter weights ({weight_bytes / 2**20:.1f} MiB) leave no room for a "
            f"row tile within the VMEM tile budget ({tile_budget / 2**20:.1f} MiB)")
    max_tm = (avail // per_row) // row_mult * row_mult

    # Keep >= ~8 grid blocks (megacore sharding + pipeline steps), cap at
    # tile_m (~85% of HBM roofline at 512 rows), never exceed the budget.
    tm = min(int(tile_m), int(max_tm),
             _round_up(pl.cdiv(n, 8), row_mult),
             _round_up(n, row_mult))
    tm = max(row_mult, tm // row_mult * row_mult)
    n_blocks = pl.cdiv(n, tm)

    # Deeper activation buffering only if VMEM and step count allow it.
    spare = tile_budget - weight_bytes - tm * per_row
    act_buffers = 3 if (n_blocks >= 4 and spare >= 2 * tm * H * itemsize) else None

    # ---- operands (zero-padding is exact through the adapter math) ---------
    x2d = x.reshape(n, hidden)
    if pad_hidden:
        x2d = jnp.pad(x2d, ((0, 0), (0, H - hidden)))
    w_down = params["w_down"].astype(dtype)
    w_up = params["w_up"].astype(dtype)
    b_down = params["b_down"].astype(dtype).reshape(1, bottleneck)
    b_up = params["b_up"].astype(dtype).reshape(1, hidden)
    if needs_col_pad:
        w_down = jnp.pad(w_down, ((0, H - hidden), (0, B - bottleneck)))
        w_up = jnp.pad(w_up, ((0, B - bottleneck), (0, H - hidden)))
        b_down = jnp.pad(b_down, ((0, 0), (0, B - bottleneck)))
        b_up = jnp.pad(b_up, ((0, 0), (0, H - hidden)))

    # Alias x -> out only when x2d is a fresh padded copy; otherwise the alias
    # would force XLA to insert a protective copy of the caller's buffer.
    io_aliases = {0: 0} if pad_hidden else {}

    # ---- advisory cost estimate --------------------------------------------
    flops = 4 * n * H * B                            # two matmuls, 2 flops/MAC
    bytes_accessed = (2 * n * H + 2 * H * B + B + H) * itemsize
    cost = pl.CostEstimate(flops=int(flops), transcendentals=0,
                           bytes_accessed=int(bytes_accessed))

    out2d = pl.pallas_call(
        _adapter_kernel,
        out_shape=jax.ShapeDtypeStruct((n, H), dtype),
        grid_spec=pltpu.PrefetchScalarGridSpec(
            num_scalar_prefetch=0,
            grid=(n_blocks,),
            in_specs=[
                # Row-block of activations, pipelined over the grid (ragged
                # final block handled by Pallas: OOB writes are dropped).
                _make_spec((tm, H), lambda i: (i, 0), buffers=act_buffers),
                # Weights/biases: constant index_map -> resident; single-buffered.
                _make_spec((H, B), lambda i: (0, 0), buffers=1),   # W_down
                _make_spec((1, B), lambda i: (0, 0), buffers=1),   # b_down
                _make_spec((B, H), lambda i: (0, 0), buffers=1),   # W_up
                _make_spec((1, H), lambda i: (0, 0), buffers=1),   # b_up
            ],
            out_specs=_make_spec((tm, H), lambda i: (i, 0), buffers=act_buffers),
        ),
        compiler_params=pltpu.CompilerParams(
            # "parallel" lets Mosaic shard row-blocks across both v7x TCs.
            dimension_semantics=("parallel",),
            vmem_limit_bytes=vmem_limit),
        cost_estimate=cost,
        input_output_aliases=io_aliases,
    )(x2d, w_down, b_down, w_up, b_up)

    if pad_hidden:
        out2d = out2d[:, :hidden]
    return out2d.reshape(batch, seq, hidden)


def task_optimized_adapter_fwd(x, toa_params, task="nlu", *, tile_m=512):
    """Mirror of TaskOptimizedAdapter.forward: dispatch to self.task's adapter."""
    return adapter_fwd(x, toa_params[task], tile_m=tile_m)


def init_adapter_params(key, hidden, bottleneck, dtype=jnp.float32):
    k1, k2 = jax.random.split(key)
    scale_d = 1.0 / jnp.sqrt(hidden)
    scale_u = 1.0 / jnp.sqrt(bottleneck)
    return {
        "w_down": (jax.random.normal(k1, (hidden, bottleneck)) * scale_d).astype(dtype),
        "b_down": jnp.zeros((bottleneck,), dtype),
        "w_up": (jax.random.normal(k2, (bottleneck, hidden)) * scale_u).astype(dtype),
        "b_up": jnp.zeros((hidden,), dtype),
    }


def build_task_optimized_adapter(key, tasks, hidden, bottleneck):
    """Mirror of nn.ModuleDict({t: adapter(...) for t in tasks})."""
    keys = jax.random.split(key, len(tasks))
    return {t: init_adapter_params(k, hidden, bottleneck) for t, k in zip(tasks, keys)}


def _reference_fwd(x, p):
    h = jnp.maximum(x @ p["w_down"] + p["b_down"], 0.0)
    return x + h @ p["w_up"] + p["b_up"]


if __name__ == "__main__":
    batch, seq, hidden, bottleneck = 2, 8, 32, 16
    tasks = ["nlu", "dst", "nlg"]
    current_task = "nlu"   # == self.task in the PyTorch module

    root = jax.random.PRNGKey(0)
    k_x, k_p = jax.random.split(root)
    x = jax.random.normal(k_x, (batch, seq, hidden), dtype=jnp.float32)

    toa_params = build_task_optimized_adapter(k_p, tasks, hidden, bottleneck)
    p = toa_params[current_task]
    ref = _reference_fwd(x, p)

    # f32 path (exact-ish vs reference).
    out = jax.block_until_ready(task_optimized_adapter_fwd(x, toa_params, current_task))
    assert out.shape == (batch, seq, hidden)
    assert jnp.allclose(out, ref, atol=1e-5, rtol=1e-5), "f32 mismatch vs reference"

    # Non-divisible row count exercises the in-kernel ragged-tail path.
    x_odd = x[:, :5, :]
    out_odd = jax.block_until_ready(adapter_fwd(x_odd, p))
    assert jnp.allclose(out_odd, _reference_fwd(x_odd, p), atol=1e-5, rtol=1e-5), \
        "ragged-tail mismatch vs reference"

    # bf16 speed mode: cast at the model level (kernel does no hidden astype).
    x_bf16 = x.astype(jnp.bfloat16)
    p_bf16 = jax.tree_util.tree_map(lambda a: a.astype(jnp.bfloat16), p)
    out_bf16 = jax.block_until_ready(adapter_fwd(x_bf16, p_bf16))
    assert jnp.allclose(out_bf16.astype(jnp.float32), ref, atol=5e-2, rtol=5e-2), \
        "bf16 mismatch vs reference"

    print("KERNEL_OK")
</pallas_src>

<mosaic_0001>
module attributes {stable_mosaic.version = 11 : i64} {
  func.func @_adapter_kernel(%arg0: i32, %arg1: memref<8x128xf32, #tpu.memory_space<vmem>>, %arg2: memref<128x128xf32, #tpu.memory_space<vmem>>, %arg3: memref<1x128xf32, #tpu.memory_space<vmem>>, %arg4: memref<128x128xf32, #tpu.memory_space<vmem>>, %arg5: memref<1x128xf32, #tpu.memory_space<vmem>>, %arg6: memref<8x128xf32, #tpu.memory_space<vmem>>) attributes {dimension_semantics = [#tpu.dimension_semantics<parallel>], iteration_bounds = array<i64: 2>, scalar_prefetch = 0 : i64, scratch_operands = 0 : i64, tpu.core_type = #tpu.core_type<tc>, window_params = [{transform_indices = @transform_0, window_bounds = array<i64: 8, 128>}, {pipeline_mode = #tpu.pipeline_mode<synchronous>, transform_indices = @transform_1, window_bounds = array<i64: 128, 128>}, {pipeline_mode = #tpu.pipeline_mode<synchronous>, transform_indices = @transform_2, window_bounds = array<i64: 1, 128>}, {pipeline_mode = #tpu.pipeline_mode<synchronous>, transform_indices = @transform_3, window_bounds = array<i64: 128, 128>}, {pipeline_mode = #tpu.pipeline_mode<synchronous>, transform_indices = @transform_4, window_bounds = array<i64: 1, 128>}, {transform_indices = @transform_5, window_bounds = array<i64: 8, 128>}]} {
    %c0 = arith.constant 0 : index
    %c0_0 = arith.constant 0 : index
    %0 = vector.load %arg1[%c0, %c0_0] : memref<8x128xf32, #tpu.memory_space<vmem>>, vector<8x128xf32>
    %c0_1 = arith.constant 0 : index
    %c0_2 = arith.constant 0 : index
    %1 = vector.load %arg2[%c0_1, %c0_2] : memref<128x128xf32, #tpu.memory_space<vmem>>, vector<128x128xf32>
    %cst = arith.constant dense<0.000000e+00> : vector<8x128xf32>
    %2 = tpu.matmul %0, %1, %cst {dimension_numbers = #tpu.dot_dimension_numbers<[1], [0], [0], [1], [0, 0, 1, 1], [], []>} : vector<8x128xf32>, vector<128x128xf32>, vector<8x128xf32> -> vector<8x128xf32>
    %c0_3 = arith.constant 0 : index
    %c0_4 = arith.constant 0 : index
    %3 = vector.load %arg3[%c0_3, %c0_4] : memref<1x128xf32, #tpu.memory_space<vmem>>, vector<1x128xf32>
    %4 = vector.broadcast %3 : vector<1x128xf32> to vector<8x128xf32>
    %5 = arith.addf %2, %4 : vector<8x128xf32>
    %cst_5 = arith.constant 0.000000e+00 : f32
    %6 = vector.broadcast %cst_5 : f32 to vector<8x128xf32>
    %7 = arith.maximumf %5, %6 : vector<8x128xf32>
    %c0_6 = arith.constant 0 : index
    %c0_7 = arith.constant 0 : index
    %8 = vector.load %arg4[%c0_6, %c0_7] : memref<128x128xf32, #tpu.memory_space<vmem>>, vector<128x128xf32>
    %cst_8 = arith.constant dense<0.000000e+00> : vector<8x128xf32>
    %9 = tpu.matmul %7, %8, %cst_8 {dimension_numbers = #tpu.dot_dimension_numbers<[1], [0], [0], [1], [0, 0, 1, 1], [], []>} : vector<8x128xf32>, vector<128x128xf32>, vector<8x128xf32> -> vector<8x128xf32>
    %10 = arith.addf %0, %9 : vector<8x128xf32>
    %c0_9 = arith.constant 0 : index
    %c0_10 = arith.constant 0 : index
    %11 = vector.load %arg5[%c0_9, %c0_10] : memref<1x128xf32, #tpu.memory_space<vmem>>, vector<1x128xf32>
    %12 = vector.broadcast %11 : vector<1x128xf32> to vector<8x128xf32>
    %13 = arith.addf %10, %12 : vector<8x128xf32>
    %c0_11 = arith.constant 0 : index
    %c0_12 = arith.constant 0 : index
    %14 = vector.load %arg6[%c0_11, %c0_12] : memref<8x128xf32, #tpu.memory_space<vmem>>, vector<8x128xf32>
    tpu.vector_store %arg6[%c0_11, %c0_12], %13 {strides = array<i32>} : memref<8x128xf32, #tpu.memory_space<vmem>>, vector<8x128xf32>,
    return
  }
  func.func @transform_0(%arg0: i32) -> (i32, i32) {
    %c0_i32 = arith.constant 0 : i32
    %c0_i32_0 = arith.constant 0 : i32
    return %arg0, %c0_i32 : i32, i32
  }
  func.func @transform_1(%arg0: i32) -> (i32, i32) {
    %c0_i32 = arith.constant 0 : i32
    %c0_i32_0 = arith.constant 0 : i32
    %c0_i32_1 = arith.constant 0 : i32
    return %c0_i32, %c0_i32_0 : i32, i32
  }
  func.func @transform_2(%arg0: i32) -> (i32, i32) {
    %c0_i32 = arith.constant 0 : i32
    %c0_i32_0 = arith.constant 0 : i32
    %c0_i32_1 = arith.constant 0 : i32
    return %c0_i32, %c0_i32_0 : i32, i32
  }
  func.func @transform_3(%arg0: i32) -> (i32, i32) {
    %c0_i32 = arith.constant 0 : i32
    %c0_i32_0 = arith.constant 0 : i32
    %c0_i32_1 = arith.constant 0 : i32
    return %c0_i32, %c0_i32_0 : i32, i32
  }
  func.func @transform_4(%arg0: i32) -> (i32, i32) {
    %c0_i32 = arith.constant 0 : i32
    %c0_i32_0 = arith.constant 0 : i32
    %c0_i32_1 = arith.constant 0 : i32
    return %c0_i32, %c0_i32_0 : i32, i32
  }
  func.func @transform_5(%arg0: i32) -> (i32, i32) {
    %c0_i32 = arith.constant 0 : i32
    %c0_i32_0 = arith.constant 0 : i32
    return %arg0, %c0_i32 : i32, i32
  }
}

</mosaic_0001>

<llo_original>
// kernel: adapter_fwd.1
$region0: #{adapter_fwd.1}
  #allocation0 [shape = 'u32[]', space=smem, size = 0x4, offset = 0x4, fixed_abs, tag = 'smem constant byte address 0x4 - core index']
  #allocation1 [shape = 'u32[144,128]{1,0:T(1,128)}', space=vmem, size = 0x12000, scoped, tag = 'internal scratch']
  %s0 = inlined_call_operand.vmem [shape: f32[16,128], index: 0, kind: input, shape index: {}, may-alias: {0,5}]
  %s1 = inlined_call_operand.vmem [shape: f32[128,128], index: 1, kind: input, shape index: {}]
  %s2 = inlined_call_operand.vmem [shape: f32[1,128], index: 2, kind: input, shape index: {}]
  %s3 = inlined_call_operand.vmem [shape: f32[128,128], index: 3, kind: input, shape index: {}]
  %s4 = inlined_call_operand.vmem [shape: f32[1,128], index: 4, kind: input, shape index: {}]
  %s5 = inlined_call_operand.vmem [shape: f32[16,128], index: 5, kind: output, shape index: {}, may-alias: {0,5}]
  %s6 = sld [smem:[#allocation0]]
  $region53: #{adapter_fwd.1} parent=0
    _
  %s8 = ssub.s32 1, %s6
  %s9 = scalar_select 0, %s8, %s6
  loop: start=0, step=1, limit=4
  $region2: #{adapter_fwd.1} parent=0 // loop_pre_header
    _
  $region3: #{adapter_fwd.1} parent=0 // loop_header
    %s11 = sphi 0, %s15
    %p12 = scmp.ge.s32.totalorder %s11, 4
    %s21 = sphi 0, %s23
    %s24 = sphi 0, %s21
    %s25 = sphi 0, %s24
    %s41 = sphi 0, %s25
    %s45 = sphi 0, %s45
    %s47 = sphi 0, %s45
    %s48 = sphi 0, %s47
    %s62 = sphi 0, %s48
    %s66 = sphi 0, %s66
    %s68 = sphi 0, %s66
    %s69 = sphi 0, %s68
    %s83 = sphi 0, %s69
    %s87 = sphi 0, %s87
    %s89 = sphi 0, %s87
    %s90 = sphi 0, %s89
    %s104 = sphi 0, %s90
    %s108 = sphi 0, %s108
    %s110 = sphi 0, %s108
    %s111 = sphi 0, %s110
    %s125 = sphi 0, %s111
    %s131 = sphi 0, %s133
    %s134 = sphi 0, %s131
    %s135 = sphi 0, %s134
    %s151 = sphi 0, %s135
  $region4: #{adapter_fwd.1} parent=0 // loop_header_branch
    %14 = sbr.rel (%p12) target = $region8
  $region5: #{adapter_fwd.1} parent=0 // loop_body
    %s16 = ssub.s32 %s11, 1
    %s17 = ssub.s32 %s11, 2
    %s18 = sadd.s32 %s11, 1
    %s19 = ssub.s32 %s11, %s18
    %p20 = scmp.eq.s32.totalorder %s19, 0
    %s22 = sadd.s32 %s21, 1
    %s23 = scalar_select %p20, %s21, %s22
    %p26 = pneg %p20
    %p27 = scmp.eq.s32.totalorder %s11, 1
    %p28 = por %p26, %p27
    %p29 = scmp.ne.s32.totalorder %s21, %s24
    %p30 = scmp.eq.s32.totalorder %s11, 0
    %p31 = por %p29, %p30
    %p32 = scmp.ne.s32.totalorder %s21, %s24
    %p33 = scmp.eq.s32.totalorder %s16, 1
    %p34 = por %p32, %p33
    %p35 = scmp.ne.s32.totalorder %s24, %s25
    %p36 = scmp.eq.s32.totalorder %s16, 0
    %p37 = por %p35, %p36
    %p38 = scmp.ne.s32.totalorder %s24, %s25
    %p39 = scmp.eq.s32.totalorder %s17, 1
    %p40 = por %p38, %p39
    %p42 = scmp.ne.s32.totalorder %s25, %s41
    %p43 = scmp.eq.s32.totalorder %s17, 0
    %p44 = por %p42, %p43
    %s46 = sadd.s32 %s45, 1
    %p49 = scmp.eq.s32.totalorder %s11, 1
    %p50 = scmp.ne.s32.totalorder %s45, %s47
    %p51 = scmp.eq.s32.totalorder %s11, 0
    %p52 = por %p50, %p51
    %p53 = scmp.ne.s32.totalorder %s45, %s47
    %p54 = scmp.eq.s32.totalorder %s16, 1
    %p55 = por %p53, %p54
    %p56 = scmp.ne.s32.totalorder %s47, %s48
    %p57 = scmp.eq.s32.totalorder %s16, 0
    %p58 = por %p56, %p57
    %p59 = scmp.ne.s32.totalorder %s47, %s48
    %p60 = scmp.eq.s32.totalorder %s17, 1
    %p61 = por %p59, %p60
    %p63 = scmp.ne.s32.totalorder %s48, %s62
    %p64 = scmp.eq.s32.totalorder %s17, 0
    %p65 = por %p63, %p64
    %s67 = sadd.s32 %s66, 1
    %p70 = scmp.eq.s32.totalorder %s11, 1
    %p71 = scmp.ne.s32.totalorder %s66, %s68
    %p72 = scmp.eq.s32.totalorder %s11, 0
    %p73 = por %p71, %p72
    %p74 = scmp.ne.s32.totalorder %s66, %s68
    %p75 = scmp.eq.s32.totalorder %s16, 1
    %p76 = por %p74, %p75
    %p77 = scmp.ne.s32.totalorder %s68, %s69
    %p78 = scmp.eq.s32.totalorder %s16, 0
    %p79 = por %p77, %p78
    %p80 = scmp.ne.s32.totalorder %s68, %s69
    %p81 = scmp.eq.s32.totalorder %s17, 1
    %p82 = por %p80, %p81
    %p84 = scmp.ne.s32.totalorder %s69, %s83
    %p85 = scmp.eq.s32.totalorder %s17, 0
    %p86 = por %p84, %p85
    %s88 = sadd.s32 %s87, 1
    %p91 = scmp.eq.s32.totalorder %s11, 1
    %p92 = scmp.ne.s32.totalorder %s87, %s89
    %p93 = scmp.eq.s32.totalorder %s11, 0
    %p94 = por %p92, %p93
    %p95 = scmp.ne.s32.totalorder %s87, %s89
    %p96 = scmp.eq.s32.totalorder %s16, 1
    %p97 = por %p95, %p96
    %p98 = scmp.ne.s32.totalorder %s89, %s90
    %p99 = scmp.eq.s32.totalorder %s16, 0
    %p100 = por %p98, %p99
    %p101 = scmp.ne.s32.totalorder %s89, %s90
    %p102 = scmp.eq.s32.totalorder %s17, 1
    %p103 = por %p101, %p102
    %p105 = scmp.ne.s32.totalorder %s90, %s104
    %p106 = scmp.eq.s32.totalorder %s17, 0
    %p107 = por %p105, %p106
    %s109 = sadd.s32 %s108, 1
    %p112 = scmp.eq.s32.totalorder %s11, 1
    %p113 = scmp.ne.s32.totalorder %s108, %s110
    %p114 = scmp.eq.s32.totalorder %s11, 0
    %p115 = por %p113, %p114
    %p116 = scmp.ne.s32.totalorder %s108, %s110
    %p117 = scmp.eq.s32.totalorder %s16, 1
    %p118 = por %p116, %p117
    %p119 = scmp.ne.s32.totalorder %s110, %s111
    %p120 = scmp.eq.s32.totalorder %s16, 0
    %p121 = por %p119, %p120
    %p122 = scmp.ne.s32.totalorder %s110, %s111
    %p123 = scmp.eq.s32.totalorder %s17, 1
    %p124 = por %p122, %p123
    %p126 = scmp.ne.s32.totalorder %s111, %s125
    %p127 = scmp.eq.s32.totalorder %s17, 0
    %p128 = por %p126, %p127
    %s129 = ssub.s32 %s11, %s18
    %p130 = scmp.eq.s32.totalorder %s129, 0
    %s132 = sadd.s32 %s131, 1
    %s133 = scalar_select %p130, %s131, %s132
    %p136 = pneg %p130
    %p137 = scmp.eq.s32.totalorder %s11, 1
    %p138 = por %p136, %p137
    %p139 = scmp.ne.s32.totalorder %s131, %s134
    %p140 = scmp.eq.s32.totalorder %s11, 0
    %p141 = por %p139, %p140
    %p142 = scmp.ne.s32.totalorder %s131, %s134
    %p143 = scmp.eq.s32.totalorder %s16, 1
    %p144 = por %p142, %p143
    %p145 = scmp.ne.s32.totalorder %s134, %s135
    %p146 = scmp.eq.s32.totalorder %s16, 0
    %p147 = por %p145, %p146
    %p148 = scmp.ne.s32.totalorder %s134, %s135
    %p149 = scmp.eq.s32.totalorder %s17, 1
    %p150 = por %p148, %p149
    %p152 = scmp.ne.s32.totalorder %s135, %s151
    %p153 = scmp.eq.s32.totalorder %s17, 0
    %p154 = por %p152, %p153
    %p155 = scmp.le.s32.totalorder 1, %s11
    %p156 = scmp.lt.s32.totalorder %s11, 3
    %p157 = pnand %p155, %p156
    %p158 = pneg %p157
    // Predicated region
    $region9: #{adapter_fwd.1} parent=5 // pred_check
      _
    $region10: #{adapter_fwd.1} parent=5 // pred_check_branch
      %160 = sbr.rel (%p157) target = $region12
    $region11: #{adapter_fwd.1} parent=5 // pred_region
      %s161 = ssub.s32 %s11, 1
      // Predicated region
      $region13: #{adapter_fwd.1} parent=11 // pred_check
        %p162 = pneg %p58
      $region14: #{adapter_fwd.1} parent=11 // pred_check_branch
        %164 = sbr.rel (%p162) target = $region16
      $region15: #{adapter_fwd.1} parent=11 // pred_region
        _
      $region16: #{adapter_fwd.1} parent=11 // pred_fallthru
        _
      // Predicated region
      $region17: #{adapter_fwd.1} parent=11 // pred_check
        %p165 = pneg %p79
      $region18: #{adapter_fwd.1} parent=11 // pred_check_branch
        %167 = sbr.rel (%p165) target = $region20
      $region19: #{adapter_fwd.1} parent=11 // pred_region
        _
      $region20: #{adapter_fwd.1} parent=11 // pred_fallthru
        _
      // Predicated region
      $region21: #{adapter_fwd.1} parent=11 // pred_check
        %p168 = pneg %p100
      $region22: #{adapter_fwd.1} parent=11 // pred_check_branch
        %170 = sbr.rel (%p168) target = $region24
      $region23: #{adapter_fwd.1} parent=11 // pred_region
        _
      $region24: #{adapter_fwd.1} parent=11 // pred_fallthru
        _
      // Predicated region
      $region25: #{adapter_fwd.1} parent=11 // pred_check
        %p171 = pneg %p121
      $region26: #{adapter_fwd.1} parent=11 // pred_check_branch
        %173 = sbr.rel (%p171) target = $region28
      $region27: #{adapter_fwd.1} parent=11 // pred_region
        _
      $region28: #{adapter_fwd.1} parent=11 // pred_fallthru
        _
    $region12: #{adapter_fwd.1} parent=5 // pred_fallthru
      _
    %p174 = scmp.lt.s32.totalorder %s11, 2
    // Predicated region
    $region29: #{adapter_fwd.1} parent=5 // pred_check
      %p175 = pneg %p174
    $region30: #{adapter_fwd.1} parent=5 // pred_check_branch
      %177 = sbr.rel (%p175) target = $region32
    $region31: #{adapter_fwd.1} parent=5 // pred_region
      // Predicated region
      $region33: #{adapter_fwd.1} parent=31 // pred_check
        %p178 = pneg %p31
      $region34: #{adapter_fwd.1} parent=31 // pred_check_branch
        %180 = sbr.rel (%p178) target = $region36
      $region35: #{adapter_fwd.1} parent=31 // pred_region
        %p181 = scmp.lt.s32.totalorder %s11, 1
        %s182 = scalar_select %p181, %s11, 1
        %s183 = smul.addr %s182, 8
        %s184 = scalar_lea.vmem %s0, %s183
      $region36: #{adapter_fwd.1} parent=31 // pred_fallthru
        _
    $region32: #{adapter_fwd.1} parent=5 // pred_fallthru
      _
    %p185 = scmp.le.s32.totalorder 1, %s11
    %p186 = scmp.lt.s32.totalorder %s11, 3
    %p187 = pnand %p185, %p186
    %p188 = pneg %p187
    // Predicated region
    $region37: #{adapter_fwd.1} parent=5 // pred_check
      _
    $region38: #{adapter_fwd.1} parent=5 // pred_check_branch
      %190 = sbr.rel (%p187) target = $region40
    $region39: #{adapter_fwd.1} parent=5 // pred_region
      %s191 = ssub.s32 %s11, 1
      %p192 = scmp.lt.s32.totalorder %s16, 1
      %s193 = scalar_select %p192, %s16, 1
      %s194 = smul.addr %s193, 8
      %s195 = scalar_lea.vmem %s0, %s194
      %p196 = pneg %p37
      %p197 = pneg %p34
      %p198 = pneg %p58
      %p199 = pneg %p55
      %p200 = pneg %p79
      %p201 = pneg %p76
      %p202 = pneg %p100
      %p203 = pneg %p97
      %p204 = pneg %p121
      %p205 = pneg %p118
      %p206 = pneg %p147
      %p207 = pneg %p144
      %p208 = scmp.lt.s32.totalorder %s16, 1
      %s209 = scalar_select %p208, %s16, 1
      %s210 = smul.addr %s209, 8
      %s211 = scalar_lea.vmem %s5, %s210
      %p212 = scmp.lt.s32.totalorder %s16, 1
      %s213 = scalar_select %p212, %s16, 1
      %s214 = smul.addr %s213, 8
      %s215 = scalar_lea.vmem %s0, %s214
      %p216 = scmp.lt.s32.totalorder %s16, 1
      %s217 = scalar_select %p216, %s16, 1
      %s218 = smul.addr %s217, 8
      %s219 = scalar_lea.vmem %s5, %s218
      %v220 = vld [vmem:[%s215] sm:$0xff]
      %v221 = vld [vmem:[%s1] sm:$0xff]
      %v222 = vld [vmem:[%s1 + $0x8] sm:$0xff]
      %v223 = vld [vmem:[%s1 + $0x10] sm:$0xff]
      %v224 = vld [vmem:[%s1 + $0x18] sm:$0xff]
      %v225 = vld [vmem:[%s1 + $0x20] sm:$0xff]
      %v226 = vld [vmem:[%s1 + $0x28] sm:$0xff]
      %v227 = vld [vmem:[%s1 + $0x30] sm:$0xff]
      %v228 = vld [vmem:[%s1 + $0x38] sm:$0xff]
      %v229 = vld [vmem:[%s1 + $0x40] sm:$0xff]
      %v230 = vld [vmem:[%s1 + $0x48] sm:$0xff]
      %v231 = vld [vmem:[%s1 + $0x50] sm:$0xff]
      %v232 = vld [vmem:[%s1 + $0x58] sm:$0xff]
      %v233 = vld [vmem:[%s1 + $0x60] sm:$0xff]
      %v234 = vld [vmem:[%s1 + $0x68] sm:$0xff]
      %v235 = vld [vmem:[%s1 + $0x70] sm:$0xff]
      %v236 = vld [vmem:[%s1 + $0x78] sm:$0xff]
      %v237 = vld [vmem:[%s2] sm:$0x1]
      %v239 = vlaneseq
      %v240 = vshrl.u32 %v239, 7
      %v241 = vsub.s32 0, %v240
      %v242 = vrot.slane %v237, %v241
      %244 = vmatprep.subr.mxu0 0.0
      %245 = vmatpush1.msra.mxu0 %v221
      %246 = vmatprep.subr.mxu0 0.0
      %247 = vmatpush1.msra.mxu0 %v222
      %248 = vmatprep.subr.mxu0 0.0
      %249 = vmatpush1.msra.mxu0 %v223
      %250 = vmatprep.subr.mxu0 0.0
      %251 = vmatpush1.msra.mxu0 %v224
      %252 = vmatprep.subr.mxu0 0.0
      %253 = vmatpush1.msra.mxu0 %v225
      %254 = vmatprep.subr.mxu0 0.0
      %255 = vmatpush1.msra.mxu0 %v226
      %256 = vmatprep.subr.mxu0 0.0
      %257 = vmatpush1.msra.mxu0 %v227
      %258 = vmatprep.subr.mxu0 0.0
      %259 = vmatpush1.msra.mxu0 %v228
      %260 = vmatprep.subr.mxu0 0.0
      %261 = vmatpush1.msra.mxu0 %v229
      %262 = vmatprep.subr.mxu0 0.0
      %263 = vmatpush1.msra.mxu0 %v230
      %264 = vmatprep.subr.mxu0 0.0
      %265 = vmatpush1.msra.mxu0 %v231
      %266 = vmatprep.subr.mxu0 0.0
      %267 = vmatpush1.msra.mxu0 %v232
      %268 = vmatprep.subr.mxu0 0.0
      %269 = vmatpush1.msra.mxu0 %v233
      %270 = vmatprep.subr.mxu0 0.0
      %271 = vmatpush1.msra.mxu0 %v234
      %272 = vmatprep.subr.mxu0 0.0
      %273 = vmatpush1.msra.mxu0 %v235
      %274 = vmatprep.subr.mxu0 0.0
      %275 = vmatpush1.msra.mxu0 %v236
      %276 = vmatprep.subr.mxu0 0.0
      %277 = vmatpush1.msra.mxu0 0.0
      %278 = vmatprep.subr.mxu0 0.0
      %279 = vmatpush1.msra.mxu0 0.0
      %280 = vmatprep.subr.mxu0 0.0
      %281 = vmatpush1.msra.mxu0 0.0
      %282 = vmatprep.subr.mxu0 0.0
      %283 = vmatpush1.msra.mxu0 0.0
      %284 = vmatprep.subr.mxu0 0.0
      %285 = vmatpush1.msra.mxu0 0.0
      %286 = vmatprep.subr.mxu0 0.0
      %287 = vmatpush1.msra.mxu0 0.0
      %288 = vmatprep.subr.mxu0 0.0
      %289 = vmatpush1.msra.mxu0 0.0
      %290 = vmatprep.subr.mxu0 0.0
      %291 = vmatpush1.msra.mxu0 0.0
      %292 = vmatprep.subr.mxu0 0.0
      %293 = vmatpush1.msra.mxu0 0.0
      %294 = vmatprep.subr.mxu0 0.0
      %295 = vmatpush1.msra.mxu0 0.0
      %296 = vmatprep.subr.mxu0 0.0
      %297 = vmatpush1.msra.mxu0 0.0
      %298 = vmatprep.subr.mxu0 0.0
      %299 = vmatpush1.msra.mxu0 0.0
      %300 = vmatprep.subr.mxu0 0.0
      %301 = vmatpush1.msra.mxu0 0.0
      %302 = vmatprep.subr.mxu0 0.0
      %303 = vmatpush1.msra.mxu0 0.0
      %304 = vmatprep.subr.mxu0 0.0
      %305 = vmatpush1.msra.mxu0 0.0
      %306 = vmatprep.subr.mxu0 0.0
      %307 = vmatpush1.msra.mxu0 0.0
      %308 = vmatprep.mubr.f32.mxu0 0.0
      %309 = vmatmul.mubr.f32.gmra.mrb[0].mxu0 %v220
      %v310 = vpop.f32.mrb[0].mxu0
      %v311 = vadd.f32 %v242, %v310
      %v312 = vpop.f32.mrb[0].mxu0
      %313 = vdwg.mxu0
      %v314 = vmax.f32 %v311, 0.0
      %v315 = vld [vmem:[%s3] sm:$0xff]
      %v316 = vld [vmem:[%s3 + $0x8] sm:$0xff]
      %v317 = vld [vmem:[%s3 + $0x10] sm:$0xff]
      %v318 = vld [vmem:[%s3 + $0x18] sm:$0xff]
      %v319 = vld [vmem:[%s3 + $0x20] sm:$0xff]
      %v320 = vld [vmem:[%s3 + $0x28] sm:$0xff]
      %v321 = vld [vmem:[%s3 + $0x30] sm:$0xff]
      %v322 = vld [vmem:[%s3 + $0x38] sm:$0xff]
      %v323 = vld [vmem:[%s3 + $0x40] sm:$0xff]
      %v324 = vld [vmem:[%s3 + $0x48] sm:$0xff]
      %v325 = vld [vmem:[%s3 + $0x50] sm:$0xff]
      %v326 = vld [vmem:[%s3 + $0x58] sm:$0xff]
      %v327 = vld [vmem:[%s3 + $0x60] sm:$0xff]
      %v328 = vld [vmem:[%s3 + $0x68] sm:$0xff]
      %v329 = vld [vmem:[%s3 + $0x70] sm:$0xff]
      %v330 = vld [vmem:[%s3 + $0x78] sm:$0xff]
      %331 = vmatprep.subr.mxu0 0.0
      %332 = vmatpush1.msra.mxu0 %v315
      %333 = vmatprep.subr.mxu0 0.0
      %334 = vmatpush1.msra.mxu0 %v316
      %335 = vmatprep.subr.mxu0 0.0
      %336 = vmatpush1.msra.mxu0 %v317
      %337 = vmatprep.subr.mxu0 0.0
      %338 = vmatpush1.msra.mxu0 %v318
      %339 = vmatprep.subr.mxu0 0.0
      %340 = vmatpush1.msra.mxu0 %v319
      %341 = vmatprep.subr.mxu0 0.0
      %342 = vmatpush1.msra.mxu0 %v320
      %343 = vmatprep.subr.mxu0 0.0
      %344 = vmatpush1.msra.mxu0 %v321
      %345 = vmatprep.subr.mxu0 0.0
      %346 = vmatpush1.msra.mxu0 %v322
      %347 = vmatprep.subr.mxu0 0.0
      %348 = vmatpush1.msra.mxu0 %v323
      %349 = vmatprep.subr.mxu0 0.0
      %350 = vmatpush1.msra.mxu0 %v324
      %351 = vmatprep.subr.mxu0 0.0
      %352 = vmatpush1.msra.mxu0 %v325
      %353 = vmatprep.subr.mxu0 0.0
      %354 = vmatpush1.msra.mxu0 %v326
      %355 = vmatprep.subr.mxu0 0.0
      %356 = vmatpush1.msra.mxu0 %v327
      %357 = vmatprep.subr.mxu0 0.0
      %358 = vmatpush1.msra.mxu0 %v328
      %359 = vmatprep.subr.mxu0 0.0
      %360 = vmatpush1.msra.mxu0 %v329
      %361 = vmatprep.subr.mxu0 0.0
      %362 = vmatpush1.msra.mxu0 %v330
      %363 = vmatprep.subr.mxu0 0.0
      %364 = vmatpush1.msra.mxu0 0.0
      %365 = vmatprep.subr.mxu0 0.0
      %366 = vmatpush1.msra.mxu0 0.0
      %367 = vmatprep.subr.mxu0 0.0
      %368 = vmatpush1.msra.mxu0 0.0
      %369 = vmatprep.subr.mxu0 0.0
      %370 = vmatpush1.msra.mxu0 0.0
      %371 = vmatprep.subr.mxu0 0.0
      %372 = vmatpush1.msra.mxu0 0.0
      %373 = vmatprep.subr.mxu0 0.0
      %374 = vmatpush1.msra.mxu0 0.0
      %375 = vmatprep.subr.mxu0 0.0
      %376 = vmatpush1.msra.mxu0 0.0
      %377 = vmatprep.subr.mxu0 0.0
      %378 = vmatpush1.msra.mxu0 0.0
      %379 = vmatprep.subr.mxu0 0.0
      %380 = vmatpush1.msra.mxu0 0.0
      %381 = vmatprep.subr.mxu0 0.0
      %382 = vmatpush1.msra.mxu0 0.0
      %383 = vmatprep.subr.mxu0 0.0
      %384 = vmatpush1.msra.mxu0 0.0
      %385 = vmatprep.subr.mxu0 0.0
      %386 = vmatpush1.msra.mxu0 0.0
      %387 = vmatprep.subr.mxu0 0.0
      %388 = vmatpush1.msra.mxu0 0.0
      %389 = vmatprep.subr.mxu0 0.0
      %390 = vmatpush1.msra.mxu0 0.0
      %391 = vmatprep.subr.mxu0 0.0
      %392 = vmatpush1.msra.mxu0 0.0
      %393 = vmatprep.subr.mxu0 0.0
      %394 = vmatpush1.msra.mxu0 0.0
      %395 = vmatprep.mubr.f32.mxu0 0.0
      %396 = vmatmul.mubr.f32.gmra.mrb[0].mxu0 %v314
      %v397 = vpop.f32.mrb[0].mxu0
      %v398 = vadd.f32 0.0, %v397
      %v399 = vpop.f32.mrb[0].mxu0
      %400 = vdwg.mxu0
      %v401 = vadd.f32 %v220, %v398
      %v402 = vld [vmem:[%s4] sm:$0x1]
      %v404 = vlaneseq
      %v405 = vshrl.u32 %v404, 7
      %v406 = vsub.s32 0, %v405
      %v407 = vrot.slane %v402, %v406
      %v409 = vadd.f32 %v401, %v407
      %410 = vst [vmem:[%s219] sm:$0xff] %v409
      %p411 = scmp.lt.s32.totalorder %s16, 1
      %s412 = scalar_select %p411, %s16, 1
      %s413 = smul.addr %s412, 8
      %s414 = scalar_lea.vmem %s5, %s413
      // Predicated region
      $region41: #{adapter_fwd.1} parent=39 // pred_check
        %p415 = pneg %p144
      $region42: #{adapter_fwd.1} parent=39 // pred_check_branch
        %417 = sbr.rel (%p415) target = $region44
      $region43: #{adapter_fwd.1} parent=39 // pred_region
        _
      $region44: #{adapter_fwd.1} parent=39 // pred_fallthru
        _
    $region40: #{adapter_fwd.1} parent=5 // pred_fallthru
      _
    %p418 = scmp.le.s32.totalorder 2, %s11
    // Predicated region
    $region45: #{adapter_fwd.1} parent=5 // pred_check
      %p419 = pneg %p418
    $region46: #{adapter_fwd.1} parent=5 // pred_check_branch
      %421 = sbr.rel (%p419) target = $region48
    $region47: #{adapter_fwd.1} parent=5 // pred_region
      %s422 = ssub.s32 %s11, 2
      // Predicated region
      $region49: #{adapter_fwd.1} parent=47 // pred_check
        %p423 = pneg %p150
      $region50: #{adapter_fwd.1} parent=47 // pred_check_branch
        %425 = sbr.rel (%p423) target = $region52
      $region51: #{adapter_fwd.1} parent=47 // pred_region
        %p426 = scmp.lt.s32.totalorder %s17, 1
        %s427 = scalar_select %p426, %s17, 1
        %s428 = smul.addr %s427, 8
        %s429 = scalar_lea.vmem %s5, %s428
      $region52: #{adapter_fwd.1} parent=47 // pred_fallthru
        _
    $region48: #{adapter_fwd.1} parent=5 // pred_fallthru
      _
  $region6: #{adapter_fwd.1} parent=0 // loop_footer
    %s15 = sadd.s32 1, %s11
  $region7: #{adapter_fwd.1} parent=0 // loop_footer_branch
    %10 = sbr.rel target = $region3
  $region8: #{adapter_fwd.1} parent=0 // loop_exit
    _

</llo_original>
